<compile_context>
chip_gen: v7x
topology: tpu7x:2x2x1
jax: 0.10.0
libtpu: 0.0.40
codegen_flags: <defaults>
</compile_context>

<pallas_src>
import functools

import jax
import jax.numpy as jnp
from jax.experimental import pallas as pl
from jax.experimental.pallas import tpu as pltpu


def layernorm_kernel(x_ref, a_ref, b_ref, o_ref, *, eps):
    """One grid step: normalize a (row_tile, F) block along the last axis."""
    x = x_ref[...].astype(jnp.float32)          # native-dtype wire, f32 compute
    n = x.shape[-1]

    # torch.std default is unbiased (ddof = 1); a single-element row is NaN,
    # matching torch semantics exactly.
    inv_nm1 = 1.0 / (n - 1) if n > 1 else float("nan")

    mean = jnp.mean(x, axis=-1, keepdims=True)
    # Reduction pass: (x - mean) here is a short-lived temp consumed by the
    # sum; it is not held live for the output expression.
    var = jnp.sum((x - mean) * (x - mean), axis=-1, keepdims=True) * inv_nm1

    # One exact reciprocal per row (EUP path, cheap), broadcast-multiplied.
    # approx=False keeps full f32 precision for the 1e-5 reference tolerance.
    inv = pl.reciprocal(jnp.sqrt(var) + eps, approx=False)

    # Output pass: recompute (x - mean) so the centered value fuses straight
    # into the store instead of living as a full-tile f32 temporary across
    # the reduction (saves a VMEM temp + a full-tile store/reload).
    o_ref[...] = ((x - mean) * (inv * a_ref[...]) + b_ref[...]).astype(o_ref.dtype)


def _scoped_vmem_bytes():
    """Scoped-VMEM budget: physical minus headroom, not physical // 2.

    v5e/v6e report 128 MiB -> 96 MiB scoped; v7x reports 64 MiB per TC ->
    52 MiB scoped.  We additionally only fill ~70% of this budget with blocks,
    which also covers the case where the query reports per-chip capacity on a
    2-TC part.
    """
    try:
        phys = int(pltpu.get_tpu_info().vmem_capacity_bytes)
    except Exception:
        phys = 64 << 20                          # conservative fallback (v7x)
    return max(min(phys - (12 << 20), 96 << 20), 16 << 20)


def _choose_row_tile(rows, features, dtype, vmem_limit_bytes):
    """Row tile sized by bytes-per-step and VMEM, with a pipeline-depth floor."""
    itemsize = jnp.dtype(dtype).itemsize
    sub = 16 if itemsize < 4 else 8              # bf16 packs 16 sublanes, f32 packs 8

    # Per-row VMEM footprint: double-buffered input + output blocks (native
    # dtype) plus ~3 f32-sized in-kernel temporaries (upcast + output working
    # set).  Fill at most ~70% of the scoped budget.
    bytes_per_row = features * (4 * itemsize + 3 * 4)
    tile_vmem = int(0.70 * vmem_limit_bytes) // max(bytes_per_row, 1)

    # Bytes-per-step target: ~4 MiB of input per grid step keeps the fixed
    # per-step overhead (~0.35 us) under ~10% of the DMA time on all
    # generations, including v7x's 3.2 TB/s HBM.
    target_step_bytes = 4 << 20
    tile_bytes = max(target_step_bytes // max(features * itemsize, 1), sub)

    tile = min(tile_vmem, tile_bytes)

    # Pipeline-depth floor: keep >= 8 grid steps total (>= 4 per v7x
    # TensorCore) so double-buffering overlaps DMA with compute.
    if rows >= 8 * sub:
        eighth = -(-rows // 8)                   # cdiv(rows, 8)
        eighth = -(-eighth // sub) * sub         # round up to sublane multiple
        tile = min(tile, eighth)
    else:
        tile = min(tile, rows)                   # tiny input: block = full extent

    tile = max(tile, 1)
    if tile >= sub:
        tile = (tile // sub) * sub               # sublane-align large tiles
    return tile


def layer_norm(x, a_2, b_2, eps=1e-6, row_tile=None):
    """x: (..., features); a_2, b_2: (features,)."""
    orig_shape = x.shape
    features = orig_shape[-1]
    rows = 1
    for d in orig_shape[:-1]:
        rows *= d
    x2 = x.reshape(rows, features)

    vmem_limit = _scoped_vmem_bytes()
    if row_tile is None:
        row_tile = _choose_row_tile(rows, features, x.dtype, vmem_limit)

    # Grid-invariant, tiny: pass already in f32 so the kernel does no casts.
    a2 = jnp.asarray(a_2, dtype=jnp.float32).reshape(1, features)
    b2 = jnp.asarray(b_2, dtype=jnp.float32).reshape(1, features)

    grid = (pl.cdiv(rows, row_tile),)            # ragged last block: OOB rows dropped

    kernel = functools.partial(layernorm_kernel, eps=float(eps))

    out = pl.pallas_call(
        kernel,
        out_shape=jax.ShapeDtypeStruct((rows, features), x.dtype),
        grid_spec=pltpu.PrefetchScalarGridSpec(
            num_scalar_prefetch=0,
            grid=grid,
            in_specs=[
                pl.BlockSpec((row_tile, features), lambda i: (i, 0)),
                pl.BlockSpec((1, features), lambda i: (0, 0)),
                pl.BlockSpec((1, features), lambda i: (0, 0)),
            ],
            out_specs=pl.BlockSpec((row_tile, features), lambda i: (i, 0)),
        ),
        compiler_params=pltpu.CompilerParams(
            dimension_semantics=("parallel",),
            vmem_limit_bytes=vmem_limit,
        ),
    )(x2, a2, b2)

    return out.reshape(orig_shape)


if __name__ == "__main__":
    key = jax.random.PRNGKey(0)
    batch, seq, hidden = 2, 8, 32

    x = jax.random.normal(key, (batch, seq, hidden), dtype=jnp.float32)

    # nn.Parameter(torch.ones(features)) / nn.Parameter(torch.zeros(features))
    a_2 = jnp.ones((hidden,), dtype=jnp.float32)
    b_2 = jnp.zeros((hidden,), dtype=jnp.float32)

    out = layer_norm(x, a_2, b_2, eps=1e-6)
    jax.block_until_ready(out)

    # reference (pure JAX, torch semantics: unbiased std, normalize by std+eps)
    mean = jnp.mean(x, axis=-1, keepdims=True)
    std = jnp.std(x, axis=-1, keepdims=True, ddof=1)
    ref = a_2 * (x - mean) / (std + 1e-6) + b_2
    assert jnp.allclose(out, ref, atol=1e-5, rtol=1e-5), "mismatch vs reference"

    print("KERNEL_OK")
</pallas_src>

<mosaic_0001>
module attributes {stable_mosaic.version = 11 : i64} {
  func.func @layernorm_kernel(%arg0: i32, %arg1: memref<16x32xf32, #tpu.memory_space<vmem>>, %arg2: memref<1x32xf32, #tpu.memory_space<vmem>>, %arg3: memref<1x32xf32, #tpu.memory_space<vmem>>, %arg4: memref<16x32xf32, #tpu.memory_space<vmem>>) attributes {dimension_semantics = [#tpu.dimension_semantics<parallel>], iteration_bounds = array<i64: 1>, scalar_prefetch = 0 : i64, scratch_operands = 0 : i64, tpu.core_type = #tpu.core_type<tc>, window_params = [{transform_indices = @transform_0, window_bounds = array<i64: 16, 32>}, {pipeline_mode = #tpu.pipeline_mode<synchronous>, transform_indices = @transform_1, window_bounds = array<i64: 1, 32>}, {pipeline_mode = #tpu.pipeline_mode<synchronous>, transform_indices = @transform_2, window_bounds = array<i64: 1, 32>}, {transform_indices = @transform_3, window_bounds = array<i64: 16, 32>}]} {
    %c0 = arith.constant 0 : index
    %c0_0 = arith.constant 0 : index
    %0 = vector.load %arg1[%c0, %c0_0] : memref<16x32xf32, #tpu.memory_space<vmem>>, vector<16x32xf32>
    %cst = arith.constant dense<0.000000e+00> : vector<16xf32>
    %1 = vector.multi_reduction <add>, %0, %cst [1] : vector<16x32xf32> to vector<16xf32>
    %2 = vector.shape_cast %1 : vector<16xf32> to vector<16x1xf32>
    %cst_1 = arith.constant 3.200000e+01 : f32
    %3 = vector.broadcast %cst_1 : f32 to vector<16x1xf32>
    %4 = arith.divf %2, %3 : vector<16x1xf32>
    %5 = vector.broadcast %4 : vector<16x1xf32> to vector<16x32xf32>
    %6 = arith.subf %0, %5 : vector<16x32xf32>
    %7 = vector.broadcast %4 : vector<16x1xf32> to vector<16x32xf32>
    %8 = arith.subf %0, %7 : vector<16x32xf32>
    %9 = arith.mulf %6, %8 : vector<16x32xf32>
    %cst_2 = arith.constant dense<0.000000e+00> : vector<16xf32>
    %10 = vector.multi_reduction <add>, %9, %cst_2 [1] : vector<16x32xf32> to vector<16xf32>
    %11 = vector.shape_cast %10 : vector<16xf32> to vector<16x1xf32>
    %cst_3 = arith.constant 0.0322580636 : f32
    %12 = vector.broadcast %cst_3 : f32 to vector<16x1xf32>
    %13 = arith.mulf %11, %12 : vector<16x1xf32>
    %14 = math.sqrt %13 : vector<16x1xf32>
    %cst_4 = arith.constant 9.99999997E-7 : f32
    %15 = vector.broadcast %cst_4 : f32 to vector<16x1xf32>
    %16 = arith.addf %14, %15 : vector<16x1xf32>
    %17 = tpu.reciprocal %16 : vector<16x1xf32> -> vector<16x1xf32>
    %18 = vector.broadcast %4 : vector<16x1xf32> to vector<16x32xf32>
    %19 = arith.subf %0, %18 : vector<16x32xf32>
    %c0_5 = arith.constant 0 : index
    %c0_6 = arith.constant 0 : index
    %20 = vector.load %arg2[%c0_5, %c0_6] : memref<1x32xf32, #tpu.memory_space<vmem>>, vector<1x32xf32>
    %21 = vector.broadcast %17 : vector<16x1xf32> to vector<16x32xf32>
    %22 = vector.broadcast %20 : vector<1x32xf32> to vector<16x32xf32>
    %23 = arith.mulf %21, %22 : vector<16x32xf32>
    %24 = arith.mulf %19, %23 : vector<16x32xf32>
    %c0_7 = arith.constant 0 : index
    %c0_8 = arith.constant 0 : index
    %25 = vector.load %arg3[%c0_7, %c0_8] : memref<1x32xf32, #tpu.memory_space<vmem>>, vector<1x32xf32>
    %26 = vector.broadcast %25 : vector<1x32xf32> to vector<16x32xf32>
    %27 = arith.addf %24, %26 : vector<16x32xf32>
    %c0_9 = arith.constant 0 : index
    %c0_10 = arith.constant 0 : index
    %28 = vector.load %arg4[%c0_9, %c0_10] : memref<16x32xf32, #tpu.memory_space<vmem>>, vector<16x32xf32>
    tpu.vector_store %arg4[%c0_9, %c0_10], %27 {strides = array<i32>} : memref<16x32xf32, #tpu.memory_space<vmem>>, vector<16x32xf32>,
    return
  }
  func.func @transform_0(%arg0: i32) -> (i32, i32) {
    %c0_i32 = arith.constant 0 : i32
    %c0_i32_0 = arith.constant 0 : i32
    return %arg0, %c0_i32 : i32, i32
  }
  func.func @transform_1(%arg0: i32) -> (i32, i32) {
    %c0_i32 = arith.constant 0 : i32
    %c0_i32_0 = arith.constant 0 : i32
    %c0_i32_1 = arith.constant 0 : i32
    return %c0_i32, %c0_i32_0 : i32, i32
  }
  func.func @transform_2(%arg0: i32) -> (i32, i32) {
    %c0_i32 = arith.constant 0 : i32
    %c0_i32_0 = arith.constant 0 : i32
    %c0_i32_1 = arith.constant 0 : i32
    return %c0_i32, %c0_i32_0 : i32, i32
  }
  func.func @transform_3(%arg0: i32) -> (i32, i32) {
    %c0_i32 = arith.constant 0 : i32
    %c0_i32_0 = arith.constant 0 : i32
    return %arg0, %c0_i32 : i32, i32
  }
}

</mosaic_0001>

<llo_original>
// kernel: tpu_custom_call.1
$region0: #{tpu_custom_call.1}
  #allocation0 [shape = 'u32[]', space=smem, size = 0x4, offset = 0x4, fixed_abs, tag = 'smem constant byte address 0x4 - core index']
  #allocation1 [shape = 'u32[144,128]{1,0:T(1,128)}', space=vmem, size = 0x12000, scoped, tag = 'internal scratch']
  %s0 = inlined_call_operand.hbm [shape: f32[16,32], index: 0, kind: input, shape index: {}]
  %s1 = inlined_call_operand.vmem [shape: f32[1,32], index: 1, kind: input, shape index: {}]
  %s2 = inlined_call_operand.vmem [shape: f32[1,32], index: 2, kind: input, shape index: {}]
  %s3 = inlined_call_operand.hbm [shape: f32[16,32], index: 3, kind: output, shape index: {}]
  %s4 = sld [smem:[#allocation0]]
  $region26: #{tpu_custom_call.1} parent=0
    _
  %s6 = ssub.s32 1, %s4
  %s7 = scalar_select 0, %s6, %s4
  $region1: #{tpu_custom_call.1} parent=0
    #allocation2 [shape = 'u8[8192]{0}', space=vmem, size = 0x2000, scoped, tag = 'input window, operand 0, single buffered']
    #allocation3 [shape = 's32[1]{0}', space=sflag, size = 0x4, scoped, tag = 'scoped memory for tpu_custom_call.1']
    #allocation4 [shape = 's32[1]{0}', space=sflag, size = 0x4, scoped, tag = 'scoped memory for tpu_custom_call.1']
    #allocation5 [shape = 'u8[8192]{0}', space=vmem, size = 0x2000, scoped, tag = 'output window, operand 0, single buffered']
    %8 = vsyncpa [#allocation3], 0
    %9 = vsyncpa [#allocation4], 0
    // Predicated region
    $region2: #{tpu_custom_call.1} parent=1 // pred_check
      _
    $region3: #{tpu_custom_call.1} parent=1 // pred_check_branch
      %11 = sbr.rel (0) target = $region5
    $region4: #{tpu_custom_call.1} parent=1 // pred_region
      %s13 = ssub.s32 256, 256
      %14 = vsyncadd [#allocation3], %s13
      %s15 = sshll.u32 [#allocation2], 4
      %s16 = int_to_ptr.vmem [resolvable:$true] %s15
      %21 = dma.hbm_to_vmem [thread:$0]  %s0, 256, %s16, [#allocation3], 128, 128, 8
    $region5: #{tpu_custom_call.1} parent=1 // pred_fallthru
      _
    // Predicated region
    $region6: #{tpu_custom_call.1} parent=1 // pred_check
      _
    $region7: #{tpu_custom_call.1} parent=1 // pred_check_branch
      %23 = sbr.rel (0) target = $region9
    $region8: #{tpu_custom_call.1} parent=1 // pred_region
      _
    $region9: #{tpu_custom_call.1} parent=1 // pred_fallthru
      _
    // Predicated region
    $region10: #{tpu_custom_call.1} parent=1 // pred_check
      _
    $region11: #{tpu_custom_call.1} parent=1 // pred_check_branch
      %25 = sbr.rel (0) target = $region13
    $region12: #{tpu_custom_call.1} parent=1 // pred_region
      _
    $region13: #{tpu_custom_call.1} parent=1 // pred_fallthru
      _
    // Predicated region
    $region14: #{tpu_custom_call.1} parent=1 // pred_check
      _
    $region15: #{tpu_custom_call.1} parent=1 // pred_check_branch
      %27 = sbr.rel (0) target = $region17
    $region16: #{tpu_custom_call.1} parent=1 // pred_region
      %28 = dma.done [#allocation3], 256
    $region17: #{tpu_custom_call.1} parent=1 // pred_fallthru
      _
    %v29 = vld [vmem:[#allocation2] sm:$0xff]
    %v30 = vld [vmem:[#allocation2 + $0x8] sm:$0xff]
    %vm31 = vcmask 261120
    %v32 = vsel %vm31, %v29, 0.0
    %33 = vadd.xlane.f32.xlu0 %v32
    %v34 = vpop.xlane.xlu0 %33
    %v35 = vsel %vm31, %v30, 0.0
    %36 = vadd.xlane.f32.xlu0 %v35
    %v37 = vpop.xlane.xlu0 %36
    %v38 = vrcp.pop 32.0
    %v39 = vmul.f32 %v34, %v38
    %v40 = vmul.f32 %v37, %v38
    %v41 = vsub.f32 %v29, %v39
    %v42 = vsub.f32 %v30, %v40
    %v43 = vmul.f32 %v41, %v41
    %v44 = vmul.f32 %v42, %v42
    %v45 = vsel %vm31, %v43, 0.0
    %46 = vadd.xlane.f32.xlu0 %v45
    %v47 = vpop.xlane.xlu0 %46
    %v48 = vsel %vm31, %v44, 0.0
    %49 = vadd.xlane.f32.xlu0 %v48
    %v50 = vpop.xlane.xlu0 %49
    %v51 = vmul.f32 %v47, 0.032258064
    %v52 = vmul.f32 %v50, 0.032258064
    %v53 = vrsqrt.pop %v51
    %v54 = vmul.f32 %v51, %v53
    %vm55 = vcmp.eq.f32.partialorder %v51, inf
    %v56 = vsel %vm55, %v51, %v54
    %vm57 = vcmp.eq.f32.partialorder %v51, 0.0
    %v58 = vand.u32 %v51, 2147483648
    %v59 = vsel %vm57, %v58, %v56
    %v60 = vrsqrt.pop %v52
    %v61 = vmul.f32 %v52, %v60
    %vm62 = vcmp.eq.f32.partialorder %v52, inf
    %v63 = vsel %vm62, %v52, %v61
    %vm64 = vcmp.eq.f32.partialorder %v52, 0.0
    %v65 = vand.u32 %v52, 2147483648
    %v66 = vsel %vm64, %v65, %v63
    %v67 = vadd.f32 %v59, 1e-06
    %v68 = vadd.f32 %v66, 1e-06
    %v69 = vrcp.pop %v67
    %v70 = vrcp.pop %v68
    %v71 = vld [vmem:[%s1] sm:$0x1]
    %v73 = vlaneseq
    %v74 = vshrl.u32 %v73, 7
    %v75 = vsub.s32 0, %v74
    %v76 = vrot.slane %v71, %v75
    %v78 = vmul.f32 %v69, %v76
    %v79 = vmul.f32 %v70, %v76
    %v80 = vmul.f32 %v41, %v78
    %v81 = vmul.f32 %v42, %v79
    %v82 = vld [vmem:[%s2] sm:$0x1]
    %v84 = vlaneseq
    %v85 = vshrl.u32 %v84, 7
    %v86 = vsub.s32 0, %v85
    %v87 = vrot.slane %v82, %v86
    %v89 = vadd.f32 %v80, %v87
    %v90 = vadd.f32 %v81, %v87
    %91 = vst.msk [vmem:[#allocation5] sm:$0xff] %vm31, %v89
    %92 = vst.msk [vmem:[#allocation5 + $0x8] sm:$0xff] %vm31, %v90
    // Predicated region
    $region18: #{tpu_custom_call.1} parent=1 // pred_check
      _
    $region19: #{tpu_custom_call.1} parent=1 // pred_check_branch
      %94 = sbr.rel (0) target = $region21
    $region20: #{tpu_custom_call.1} parent=1 // pred_region
      %s96 = ssub.s32 256, 256
      %97 = vsyncadd [#allocation4], %s96
      %s98 = sshll.u32 [#allocation5], 4
      %s99 = int_to_ptr.vmem [resolvable:$true] %s98
      %104 = dma.vmem_to_hbm [thread:$0]  %s99, 256, %s3, [#allocation4], 128, 128, 8
    $region21: #{tpu_custom_call.1} parent=1 // pred_fallthru
      _
    // Predicated region
    $region22: #{tpu_custom_call.1} parent=1 // pred_check
      _
    $region23: #{tpu_custom_call.1} parent=1 // pred_check_branch
      %106 = sbr.rel (0) target = $region25
    $region24: #{tpu_custom_call.1} parent=1 // pred_region
      %107 = dma.done [#allocation4], 256
    $region25: #{tpu_custom_call.1} parent=1 // pred_fallthru
      _
    %108 = vsyncpa [#allocation3], 1
    %109 = vsyncpa [#allocation4], 1

</llo_original>
